<compile_context>
chip_gen: v6e
topology: v6e:2x2x1
jax: 0.10.0
libtpu: 0.0.40
codegen_flags: <defaults>
</compile_context>

<pallas_src>
import jax
import jax.numpy as jnp
from jax import lax
from jax.experimental import pallas as pl
from jax.experimental.pallas import tpu as pltpu


def _mlp_softmax_kernel(x_ref, w1_ref, b1_ref, w2_ref, b2_ref, wf_ref, bf_ref, o_ref):
    """Whole MLP forward + softmax for one batch tile, fully in VMEM.

    x_ref:  (bt, d_in)    f32  activations in native layout (batch on sublanes)
    w*_ref: (out_f, in_f) f32  weights (PyTorch-native layout)
    b*_ref: (out_f, 1)    f32  biases (broadcast along lanes)
    o_ref:  (3, bt)       f32  softmax probabilities (batch on the lane axis)
    """
    x = x_ref[...].astype(jnp.float32)                       # no-op for f32 input

    # layer 0: h1ᵀ = w1 @ xᵀ  -> (h1, bt).  Rhs-transposed dot_general (same NT
    # pattern as q @ kᵀ in flash attention) avoids any explicit transpose and
    # puts batch on the 128-wide lane axis for the rest of the kernel.
    h = lax.dot_general(w1_ref[...], x, (((1,), (1,)), ((), ())),
                        preferred_element_type=jnp.float32) + b1_ref[...]
    h = jnp.maximum(h, 0.0)                                   # ReLU; dropout == identity

    # layer 1: Linear(hidden_dim, hidden_dim // 2) + ReLU
    h = jnp.dot(w2_ref[...], h, preferred_element_type=jnp.float32) + b2_ref[...]
    h = jnp.maximum(h, 0.0)

    # fc: Linear(hidden_dim // 2, 3)
    logits = jnp.dot(wf_ref[...], h, preferred_element_type=jnp.float32) + bf_ref[...]

    # numerically stable softmax over the 3-class (sublane) axis.  Exact divide:
    # the approximate EUP reciprocal was not accurate enough for the sum-to-1
    # contract, and the divided tensor is only (3, bt) so the cost is negligible.
    m = jnp.max(logits, axis=0, keepdims=True)
    e = jnp.exp(logits - m)
    denom = jnp.sum(e, axis=0, keepdims=True)
    o_ref[...] = (e / denom).astype(o_ref.dtype)


def signal_model_forward(x, params, *, batch_tile=16384, return_transposed=False):
    """x: (B, input_dim) float32 -> softmax probabilities.

    Returns (B, 3) by default (PyTorch layout).  With return_transposed=True the
    lane-dense (3, B) kernel output is returned directly, skipping the trailing
    transpose copy (preferred when the consumer can accept that layout).
    """
    w1, b1, w2, b2, wf, bf = params
    B, d_in = x.shape
    h1 = w1.shape[0]
    h2 = w2.shape[0]
    n_out = wf.shape[0]

    # Lane tile: multiple of 128.  Large default amortizes the ~0.35 us/step
    # fixed cost; clamp to the (lane-rounded) batch, and keep >= 2 grid steps on
    # batches of >= 256 so the "parallel" axis can shard across both v7x cores.
    lanes = pl.cdiv(B, 128) * 128
    batch_tile = max(128, pl.cdiv(batch_tile, 128) * 128)
    batch_tile = min(batch_tile, lanes)
    if lanes >= 256 and batch_tile >= lanes:
        batch_tile = pl.cdiv(pl.cdiv(lanes, 2), 128) * 128
    grid = (pl.cdiv(B, batch_tile),)

    in_specs = [
        # x streamed straight from HBM in its native layout; ragged last block is
        # fine (garbage rows stay lane-local and are dropped by the masked store).
        pl.BlockSpec((batch_tile, d_in), lambda i: (i, 0)),
        # weights/biases: full-array blocks, constant index_map -> VMEM-resident.
        pl.BlockSpec((h1, d_in), lambda i: (0, 0)),
        pl.BlockSpec((h1, 1), lambda i: (0, 0)),
        pl.BlockSpec((h2, h1), lambda i: (0, 0)),
        pl.BlockSpec((h2, 1), lambda i: (0, 0)),
        pl.BlockSpec((n_out, h2), lambda i: (0, 0)),
        pl.BlockSpec((n_out, 1), lambda i: (0, 0)),
    ]
    out_specs = pl.BlockSpec((n_out, batch_tile), lambda i: (0, i))

    weight_bytes = sum(int(p.size) * p.dtype.itemsize for p in params)
    cost = pl.CostEstimate(
        flops=2 * B * (d_in * h1 + h1 * h2 + h2 * n_out),
        transcendentals=B * n_out,
        bytes_accessed=B * d_in * x.dtype.itemsize + B * n_out * 4 + weight_bytes,
    )

    out_t = pl.pallas_call(
        _mlp_softmax_kernel,
        out_shape=jax.ShapeDtypeStruct((n_out, B), jnp.float32),
        grid_spec=pl.GridSpec(grid=grid, in_specs=in_specs, out_specs=out_specs),
        compiler_params=pltpu.CompilerParams(
            dimension_semantics=("parallel",),   # batch tiles are independent
        ),
        cost_estimate=cost,
    )(x, w1, b1, w2, b2, wf, bf)

    if return_transposed:
        return out_t                                              # (3, B), lane-dense
    return out_t.T                                                # (B, 3), PyTorch layout


def init_params(key, input_dim=16, hidden_dim=32):
    """Deterministic PyTorch-style init: U(-1/sqrt(fan_in), 1/sqrt(fan_in)).
    Weights stored PyTorch-native: (out_features, in_features); biases (out, 1)."""
    dims = [(input_dim, hidden_dim),
            (hidden_dim, hidden_dim // 2),
            (hidden_dim // 2, 3)]
    params = []
    for fan_in, fan_out in dims:
        key, kw, kb = jax.random.split(key, 3)
        bound = 1.0 / jnp.sqrt(jnp.float32(fan_in))
        w = jax.random.uniform(kw, (fan_out, fan_in), jnp.float32, -bound, bound)
        b = jax.random.uniform(kb, (fan_out, 1), jnp.float32, -bound, bound)
        params.extend([w, b])
    return tuple(params)


def reference_forward(x, params):
    """Plain-JAX reference for correctness checking (x: (B, d_in))."""
    w1, b1, w2, b2, wf, bf = params
    h = jnp.maximum(x @ w1.T + b1.T, 0.0)
    h = jnp.maximum(h @ w2.T + b2.T, 0.0)
    logits = h @ wf.T + bf.T
    return jax.nn.softmax(logits, axis=-1)


if __name__ == "__main__":
    key = jax.random.PRNGKey(0)
    k_x, k_p, k_x2 = jax.random.split(key, 3)

    B, INPUT_DIM, HIDDEN_DIM = 8, 16, 32
    params = init_params(k_p, input_dim=INPUT_DIM, hidden_dim=HIDDEN_DIM)

    # Small batch (single ragged tile).
    x = jax.random.normal(k_x, (B, INPUT_DIM), dtype=jnp.float32)
    out = jax.block_until_ready(signal_model_forward(x, params))
    ref = reference_forward(x, params)
    assert out.shape == (B, 3)
    assert jnp.allclose(jnp.sum(out, axis=-1), 1.0, atol=1e-3)
    assert jnp.allclose(out, ref, atol=2e-3, rtol=2e-3)

    # Larger batch: exercises the >=2-step grid and the masked ragged last block.
    B2 = 300
    x2 = jax.random.normal(k_x2, (B2, INPUT_DIM), dtype=jnp.float32)
    out2 = jax.block_until_ready(signal_model_forward(x2, params))
    ref2 = reference_forward(x2, params)
    assert out2.shape == (B2, 3)
    assert jnp.allclose(jnp.sum(out2, axis=-1), 1.0, atol=1e-3)
    assert jnp.allclose(out2, ref2, atol=2e-3, rtol=2e-3)

    print("KERNEL_OK")
</pallas_src>

<mosaic_0001>
module attributes {stable_mosaic.version = 11 : i64} {
  func.func @_mlp_softmax_kernel(%arg0: i32, %arg1: memref<128x16xf32, #tpu.memory_space<vmem>>, %arg2: memref<32x16xf32, #tpu.memory_space<vmem>>, %arg3: memref<32x1xf32, #tpu.memory_space<vmem>>, %arg4: memref<16x32xf32, #tpu.memory_space<vmem>>, %arg5: memref<16x1xf32, #tpu.memory_space<vmem>>, %arg6: memref<3x16xf32, #tpu.memory_space<vmem>>, %arg7: memref<3x1xf32, #tpu.memory_space<vmem>>, %arg8: memref<3x128xf32, #tpu.memory_space<vmem>>) attributes {dimension_semantics = [#tpu.dimension_semantics<parallel>], iteration_bounds = array<i64: 1>, scalar_prefetch = 0 : i64, scratch_operands = 0 : i64, tpu.core_type = #tpu.core_type<tc>, window_params = [{transform_indices = @transform_0, window_bounds = array<i64: 128, 16>}, {pipeline_mode = #tpu.pipeline_mode<synchronous>, transform_indices = @transform_1, window_bounds = array<i64: 32, 16>}, {pipeline_mode = #tpu.pipeline_mode<synchronous>, transform_indices = @transform_2, window_bounds = array<i64: 32, 1>}, {pipeline_mode = #tpu.pipeline_mode<synchronous>, transform_indices = @transform_3, window_bounds = array<i64: 16, 32>}, {pipeline_mode = #tpu.pipeline_mode<synchronous>, transform_indices = @transform_4, window_bounds = array<i64: 16, 1>}, {pipeline_mode = #tpu.pipeline_mode<synchronous>, transform_indices = @transform_5, window_bounds = array<i64: 3, 16>}, {pipeline_mode = #tpu.pipeline_mode<synchronous>, transform_indices = @transform_6, window_bounds = array<i64: 3, 1>}, {transform_indices = @transform_7, window_bounds = array<i64: 3, 128>}]} {
    %c0 = arith.constant 0 : index
    %c0_0 = arith.constant 0 : index
    %0 = vector.load %arg1[%c0, %c0_0] : memref<128x16xf32, #tpu.memory_space<vmem>>, vector<128x16xf32>
    %c0_1 = arith.constant 0 : index
    %c0_2 = arith.constant 0 : index
    %1 = vector.load %arg2[%c0_1, %c0_2] : memref<32x16xf32, #tpu.memory_space<vmem>>, vector<32x16xf32>
    %cst = arith.constant dense<0.000000e+00> : vector<32x128xf32>
    %2 = tpu.matmul %1, %0, %cst {dimension_numbers = #tpu.dot_dimension_numbers<[1], [1], [0], [0], [0, 0, 1, 0], [], []>} : vector<32x16xf32>, vector<128x16xf32>, vector<32x128xf32> -> vector<32x128xf32>
    %c0_3 = arith.constant 0 : index
    %c0_4 = arith.constant 0 : index
    %3 = vector.load %arg3[%c0_3, %c0_4] : memref<32x1xf32, #tpu.memory_space<vmem>>, vector<32x1xf32>
    %4 = vector.broadcast %3 : vector<32x1xf32> to vector<32x128xf32>
    %5 = arith.addf %2, %4 : vector<32x128xf32>
    %cst_5 = arith.constant 0.000000e+00 : f32
    %6 = vector.broadcast %cst_5 : f32 to vector<32x128xf32>
    %7 = arith.maximumf %5, %6 : vector<32x128xf32>
    %c0_6 = arith.constant 0 : index
    %c0_7 = arith.constant 0 : index
    %8 = vector.load %arg4[%c0_6, %c0_7] : memref<16x32xf32, #tpu.memory_space<vmem>>, vector<16x32xf32>
    %cst_8 = arith.constant dense<0.000000e+00> : vector<16x128xf32>
    %9 = tpu.matmul %8, %7, %cst_8 {dimension_numbers = #tpu.dot_dimension_numbers<[1], [0], [0], [1], [0, 0, 1, 1], [], []>} : vector<16x32xf32>, vector<32x128xf32>, vector<16x128xf32> -> vector<16x128xf32>
    %c0_9 = arith.constant 0 : index
    %c0_10 = arith.constant 0 : index
    %10 = vector.load %arg5[%c0_9, %c0_10] : memref<16x1xf32, #tpu.memory_space<vmem>>, vector<16x1xf32>
    %11 = vector.broadcast %10 : vector<16x1xf32> to vector<16x128xf32>
    %12 = arith.addf %9, %11 : vector<16x128xf32>
    %cst_11 = arith.constant 0.000000e+00 : f32
    %13 = vector.broadcast %cst_11 : f32 to vector<16x128xf32>
    %14 = arith.maximumf %12, %13 : vector<16x128xf32>
    %c0_12 = arith.constant 0 : index
    %c0_13 = arith.constant 0 : index
    %15 = vector.load %arg6[%c0_12, %c0_13] : memref<3x16xf32, #tpu.memory_space<vmem>>, vector<3x16xf32>
    %cst_14 = arith.constant dense<0.000000e+00> : vector<3x128xf32>
    %16 = tpu.matmul %15, %14, %cst_14 {dimension_numbers = #tpu.dot_dimension_numbers<[1], [0], [0], [1], [0, 0, 1, 1], [], []>} : vector<3x16xf32>, vector<16x128xf32>, vector<3x128xf32> -> vector<3x128xf32>
    %c0_15 = arith.constant 0 : index
    %c0_16 = arith.constant 0 : index
    %17 = vector.load %arg7[%c0_15, %c0_16] : memref<3x1xf32, #tpu.memory_space<vmem>>, vector<3x1xf32>
    %18 = vector.broadcast %17 : vector<3x1xf32> to vector<3x128xf32>
    %19 = arith.addf %16, %18 : vector<3x128xf32>
    %cst_17 = arith.constant dense<0xFF800000> : vector<128xf32>
    %20 = vector.multi_reduction <maximumf>, %19, %cst_17 [0] : vector<3x128xf32> to vector<128xf32>
    %21 = vector.shape_cast %20 : vector<128xf32> to vector<1x128xf32>
    %22 = vector.broadcast %21 : vector<1x128xf32> to vector<3x128xf32>
    %23 = arith.subf %19, %22 : vector<3x128xf32>
    %24 = math.exp %23 : vector<3x128xf32>
    %cst_18 = arith.constant dense<0.000000e+00> : vector<128xf32>
    %25 = vector.multi_reduction <add>, %24, %cst_18 [0] : vector<3x128xf32> to vector<128xf32>
    %26 = vector.shape_cast %25 : vector<128xf32> to vector<1x128xf32>
    %27 = vector.broadcast %26 : vector<1x128xf32> to vector<3x128xf32>
    %28 = arith.divf %24, %27 : vector<3x128xf32>
    %c0_19 = arith.constant 0 : index
    %c0_20 = arith.constant 0 : index
    %29 = vector.load %arg8[%c0_19, %c0_20] : memref<3x128xf32, #tpu.memory_space<vmem>>, vector<3x128xf32>
    tpu.vector_store %arg8[%c0_19, %c0_20], %28 {strides = array<i32>} : memref<3x128xf32, #tpu.memory_space<vmem>>, vector<3x128xf32>,
    return
  }
  func.func @transform_0(%arg0: i32) -> (i32, i32) {
    %c0_i32 = arith.constant 0 : i32
    %c0_i32_0 = arith.constant 0 : i32
    return %arg0, %c0_i32 : i32, i32
  }
  func.func @transform_1(%arg0: i32) -> (i32, i32) {
    %c0_i32 = arith.constant 0 : i32
    %c0_i32_0 = arith.constant 0 : i32
    %c0_i32_1 = arith.constant 0 : i32
    return %c0_i32, %c0_i32_0 : i32, i32
  }
  func.func @transform_2(%arg0: i32) -> (i32, i32) {
    %c0_i32 = arith.constant 0 : i32
    %c0_i32_0 = arith.constant 0 : i32
    %c0_i32_1 = arith.constant 0 : i32
    return %c0_i32, %c0_i32_0 : i32, i32
  }
  func.func @transform_3(%arg0: i32) -> (i32, i32) {
    %c0_i32 = arith.constant 0 : i32
    %c0_i32_0 = arith.constant 0 : i32
    %c0_i32_1 = arith.constant 0 : i32
    return %c0_i32, %c0_i32_0 : i32, i32
  }
  func.func @transform_4(%arg0: i32) -> (i32, i32) {
    %c0_i32 = arith.constant 0 : i32
    %c0_i32_0 = arith.constant 0 : i32
    %c0_i32_1 = arith.constant 0 : i32
    return %c0_i32, %c0_i32_0 : i32, i32
  }
  func.func @transform_5(%arg0: i32) -> (i32, i32) {
    %c0_i32 = arith.constant 0 : i32
    %c0_i32_0 = arith.constant 0 : i32
    %c0_i32_1 = arith.constant 0 : i32
    return %c0_i32, %c0_i32_0 : i32, i32
  }
  func.func @transform_6(%arg0: i32) -> (i32, i32) {
    %c0_i32 = arith.constant 0 : i32
    %c0_i32_0 = arith.constant 0 : i32
    %c0_i32_1 = arith.constant 0 : i32
    return %c0_i32, %c0_i32_0 : i32, i32
  }
  func.func @transform_7(%arg0: i32) -> (i32, i32) {
    %c0_i32 = arith.constant 0 : i32
    %c0_i32_0 = arith.constant 0 : i32
    return %c0_i32, %arg0 : i32, i32
  }
}

</mosaic_0001>

<llo_original>
// kernel: tpu_custom_call.1
$region0: #{tpu_custom_call.1}
  #allocation0 [shape = 'u32[]', space=smem, size = 0x4, offset = 0x4, fixed_abs, tag = 'smem constant byte address 0x4 - core index']
  #allocation1 [shape = 'u32[144,128]{1,0:T(1,128)}', space=vmem, size = 0x12000, scoped, tag = 'internal scratch']
  %s0 = inlined_call_operand.vmem [shape: f32[8,16], index: 0, kind: input, shape index: {}]
  %s1 = inlined_call_operand.vmem [shape: f32[32,16], index: 1, kind: input, shape index: {}]
  %s2 = inlined_call_operand.vmem [shape: f32[32,1], index: 2, kind: input, shape index: {}]
  %s3 = inlined_call_operand.vmem [shape: f32[16,32], index: 3, kind: input, shape index: {}]
  %s4 = inlined_call_operand.vmem [shape: f32[16,1], index: 4, kind: input, shape index: {}]
  %s5 = inlined_call_operand.vmem [shape: f32[3,16], index: 5, kind: input, shape index: {}]
  %s6 = inlined_call_operand.vmem [shape: f32[3,1], index: 6, kind: input, shape index: {}]
  %s7 = inlined_call_operand.hbm [shape: f32[3,8], index: 7, kind: output, shape index: {}]
  %s8 = sld [smem:[#allocation0]]
  $region38: #{tpu_custom_call.1} parent=0
    _
  %s10 = ssub.s32 1, %s8
  %s11 = scalar_select 0, %s10, %s8
  $region1: #{tpu_custom_call.1} parent=0
    #allocation2 [shape = 'u8[2048]{0}', space=vmem, size = 0x800, scoped, tag = 'output window, operand 0, single buffered']
    #allocation3 [shape = 's32[1]{0}', space=sflag, size = 0x4, scoped, tag = 'scoped memory for tpu_custom_call.1']
    %12 = vsyncpa [#allocation3], 0
    // Predicated region
    $region2: #{tpu_custom_call.1} parent=1 // pred_check
      _
    $region3: #{tpu_custom_call.1} parent=1 // pred_check_branch
      %14 = sbr.rel (0) target = $region5
    $region4: #{tpu_custom_call.1} parent=1 // pred_region
      _
    $region5: #{tpu_custom_call.1} parent=1 // pred_fallthru
      _
    // Predicated region
    $region6: #{tpu_custom_call.1} parent=1 // pred_check
      _
    $region7: #{tpu_custom_call.1} parent=1 // pred_check_branch
      %16 = sbr.rel (0) target = $region9
    $region8: #{tpu_custom_call.1} parent=1 // pred_region
      _
    $region9: #{tpu_custom_call.1} parent=1 // pred_fallthru
      _
    // Predicated region
    $region10: #{tpu_custom_call.1} parent=1 // pred_check
      _
    $region11: #{tpu_custom_call.1} parent=1 // pred_check_branch
      %18 = sbr.rel (0) target = $region13
    $region12: #{tpu_custom_call.1} parent=1 // pred_region
      _
    $region13: #{tpu_custom_call.1} parent=1 // pred_fallthru
      _
    // Predicated region
    $region14: #{tpu_custom_call.1} parent=1 // pred_check
      _
    $region15: #{tpu_custom_call.1} parent=1 // pred_check_branch
      %20 = sbr.rel (0) target = $region17
    $region16: #{tpu_custom_call.1} parent=1 // pred_region
      _
    $region17: #{tpu_custom_call.1} parent=1 // pred_fallthru
      _
    // Predicated region
    $region18: #{tpu_custom_call.1} parent=1 // pred_check
      _
    $region19: #{tpu_custom_call.1} parent=1 // pred_check_branch
      %22 = sbr.rel (0) target = $region21
    $region20: #{tpu_custom_call.1} parent=1 // pred_region
      _
    $region21: #{tpu_custom_call.1} parent=1 // pred_fallthru
      _
    // Predicated region
    $region22: #{tpu_custom_call.1} parent=1 // pred_check
      _
    $region23: #{tpu_custom_call.1} parent=1 // pred_check_branch
      %24 = sbr.rel (0) target = $region25
    $region24: #{tpu_custom_call.1} parent=1 // pred_region
      _
    $region25: #{tpu_custom_call.1} parent=1 // pred_fallthru
      _
    // Predicated region
    $region26: #{tpu_custom_call.1} parent=1 // pred_check
      _
    $region27: #{tpu_custom_call.1} parent=1 // pred_check_branch
      %26 = sbr.rel (0) target = $region29
    $region28: #{tpu_custom_call.1} parent=1 // pred_region
      _
    $region29: #{tpu_custom_call.1} parent=1 // pred_fallthru
      _
    %v27 = vld [vmem:[%s0] sm:$0xff]
    %v28 = vld [vmem:[%s0 + $0x8] sm:$0xff]
    %v29 = vld [vmem:[%s0 + $0x10] sm:$0xff]
    %v30 = vld [vmem:[%s0 + $0x18] sm:$0xff]
    %v31 = vld [vmem:[%s0 + $0x20] sm:$0xff]
    %v32 = vld [vmem:[%s0 + $0x28] sm:$0xff]
    %v33 = vld [vmem:[%s0 + $0x30] sm:$0xff]
    %v34 = vld [vmem:[%s0 + $0x38] sm:$0xff]
    %v35 = vld [vmem:[%s0 + $0x40] sm:$0xff]
    %v36 = vld [vmem:[%s0 + $0x48] sm:$0xff]
    %v37 = vld [vmem:[%s0 + $0x50] sm:$0xff]
    %v38 = vld [vmem:[%s0 + $0x58] sm:$0xff]
    %v39 = vld [vmem:[%s0 + $0x60] sm:$0xff]
    %v40 = vld [vmem:[%s0 + $0x68] sm:$0xff]
    %v41 = vld [vmem:[%s0 + $0x70] sm:$0xff]
    %v42 = vld [vmem:[%s0 + $0x78] sm:$0xff]
    %v43 = vld [vmem:[%s1] sm:$0xff]
    %v44 = vld [vmem:[%s1 + $0x8] sm:$0xff]
    %v45 = vld [vmem:[%s1 + $0x10] sm:$0xff]
    %v46 = vld [vmem:[%s1 + $0x18] sm:$0xff]
    %v47 = vld [vmem:[%s2] sm:$0xff]
    %v48 = vld [vmem:[%s2 + $0x8] sm:$0xff]
    %v49 = vld [vmem:[%s2 + $0x10] sm:$0xff]
    %v50 = vld [vmem:[%s2 + $0x18] sm:$0xff]
    %52 = vset.pattern.permute.xlu0 0
    %53 = vperm.xlu0 %52, %v47
    %v54 = vpop.permute.xlu0 %53
    %57 = vset.pattern.permute.xlu0 0
    %58 = vperm.xlu0 %57, %v48
    %v59 = vpop.permute.xlu0 %58
    %62 = vset.pattern.permute.xlu0 0
    %63 = vperm.xlu0 %62, %v49
    %v64 = vpop.permute.xlu0 %63
    %67 = vset.pattern.permute.xlu0 0
    %68 = vperm.xlu0 %67, %v50
    %v69 = vpop.permute.xlu0 %68
    %vm71 = vcmask 130048
    %v73 = vsel %vm71, %v43, 0
    %v76 = vsel %vm71, %v44, 0
    %v79 = vsel %vm71, %v45, 0
    %v82 = vsel %vm71, %v46, 0
    %v85 = vsel %vm71, %v27, 0
    %v88 = vsel %vm71, %v28, 0
    %v91 = vsel %vm71, %v29, 0
    %v94 = vsel %vm71, %v30, 0
    %v97 = vsel %vm71, %v31, 0
    %v100 = vsel %vm71, %v32, 0
    %v103 = vsel %vm71, %v33, 0
    %v106 = vsel %vm71, %v34, 0
    %v109 = vsel %vm71, %v35, 0
    %v112 = vsel %vm71, %v36, 0
    %v115 = vsel %vm71, %v37, 0
    %v118 = vsel %vm71, %v38, 0
    %v121 = vsel %vm71, %v39, 0
    %v124 = vsel %vm71, %v40, 0
    %v127 = vsel %vm71, %v41, 0
    %v130 = vsel %vm71, %v42, 0
    %132 = vmatprep.subr.mxu0 0.0
    %133 = vmatpush1.xpose.msra.mxu0 %v130
    %134 = vmatprep.subr.mxu0 0.0
    %135 = vmatpush1.xpose.msra.mxu0 %v127
    %136 = vmatprep.subr.mxu0 0.0
    %137 = vmatpush1.xpose.msra.mxu0 %v124
    %138 = vmatprep.subr.mxu0 0.0
    %139 = vmatpush1.xpose.msra.mxu0 %v121
    %140 = vmatprep.subr.mxu0 0.0
    %141 = vmatpush1.xpose.msra.mxu0 %v118
    %142 = vmatprep.subr.mxu0 0.0
    %143 = vmatpush1.xpose.msra.mxu0 %v115
    %144 = vmatprep.subr.mxu0 0.0
    %145 = vmatpush1.xpose.msra.mxu0 %v112
    %146 = vmatprep.subr.mxu0 0.0
    %147 = vmatpush1.xpose.msra.mxu0 %v109
    %148 = vmatprep.subr.mxu0 0.0
    %149 = vmatpush1.xpose.msra.mxu0 %v106
    %150 = vmatprep.subr.mxu0 0.0
    %151 = vmatpush1.xpose.msra.mxu0 %v103
    %152 = vmatprep.subr.mxu0 0.0
    %153 = vmatpush1.xpose.msra.mxu0 %v100
    %154 = vmatprep.subr.mxu0 0.0
    %155 = vmatpush1.xpose.msra.mxu0 %v97
    %156 = vmatprep.subr.mxu0 0.0
    %157 = vmatpush1.xpose.msra.mxu0 %v94
    %158 = vmatprep.subr.mxu0 0.0
    %159 = vmatpush1.xpose.msra.mxu0 %v91
    %160 = vmatprep.subr.mxu0 0.0
    %161 = vmatpush1.xpose.msra.mxu0 %v88
    %162 = vmatprep.subr.mxu0 0.0
    %163 = vmatpush1.xpose.msra.mxu0 %v85
    %164 = vmatprep.subr.mxu0 0.0
    %165 = vmatpush2.xpose.msra.mxu0 0.0
    %166 = vmatprep.subr.mxu0 0.0
    %167 = vmatpush2.xpose.msra.mxu0 0.0
    %168 = vmatprep.subr.mxu0 0.0
    %169 = vmatpush2.xpose.msra.mxu0 0.0
    %170 = vmatprep.subr.mxu0 0.0
    %171 = vmatpush2.xpose.msra.mxu0 0.0
    %172 = vmatprep.subr.mxu0 0.0
    %173 = vmatpush2.xpose.msra.mxu0 0.0
    %174 = vmatprep.subr.mxu0 0.0
    %175 = vmatpush2.xpose.msra.mxu0 0.0
    %176 = vmatprep.subr.mxu0 0.0
    %177 = vmatpush2.xpose.msra.mxu0 0.0
    %178 = vmatprep.subr.mxu0 0.0
    %179 = vmatpush2.xpose.msra.mxu0 0.0
    %180 = vmatprep.subr.mxu0 0.0
    %181 = vmatpush2.xpose.msra.mxu0 0.0
    %182 = vmatprep.subr.mxu0 0.0
    %183 = vmatpush2.xpose.msra.mxu0 0.0
    %184 = vmatprep.subr.mxu0 0.0
    %185 = vmatpush2.xpose.msra.mxu0 0.0
    %186 = vmatprep.subr.mxu0 0.0
    %187 = vmatpush2.xpose.msra.mxu0 0.0
    %188 = vmatprep.subr.mxu0 0.0
    %189 = vmatpush2.xpose.msra.mxu0 0.0
    %190 = vmatprep.subr.mxu0 0.0
    %191 = vmatpush2.xpose.msra.mxu0 0.0
    %192 = vmatprep.subr.mxu0 0.0
    %193 = vmatpush2.xpose.msra.mxu0 0.0
    %194 = vmatprep.subr.mxu0 0.0
    %195 = vmatpush2.xpose.msra.mxu0 0.0
    %196 = vmatprep.mubr.f32.mxu0 0.0
    %197 = vmatmul.mubr.f32.gmra.mxu0 %v73
    %v198 = vpop.f32.mrf.mxu0
    %v199 = vadd.f32 %v54, %v198
    %v200 = vpop.f32.mrf.mxu0
    %201 = vmatprep.mubr.f32.mxu0 0.0
    %202 = vmatmul.mubr.f32.gmra.mxu0 %v76
    %v203 = vpop.f32.mrf.mxu0
    %v204 = vadd.f32 %v59, %v203
    %v205 = vpop.f32.mrf.mxu0
    %206 = vmatprep.mubr.f32.mxu0 0.0
    %207 = vmatmul.mubr.f32.gmra.mxu0 %v79
    %v208 = vpop.f32.mrf.mxu0
    %v209 = vadd.f32 %v64, %v208
    %v210 = vpop.f32.mrf.mxu0
    %211 = vmatprep.mubr.f32.mxu0 0.0
    %212 = vmatmul.mubr.f32.gmra.mxu0 %v82
    %v213 = vpop.f32.mrf.mxu0
    %v214 = vadd.f32 %v69, %v213
    %v215 = vpop.f32.mrf.mxu0
    %216 = vdwg.mxu0
    %v217 = vmax.f32 %v199, 0.0
    %v218 = vmax.f32 %v204, 0.0
    %v219 = vmax.f32 %v209, 0.0
    %v220 = vmax.f32 %v214, 0.0
    %v221 = vld [vmem:[%s3] sm:$0xff]
    %v222 = vld [vmem:[%s3 + $0x8] sm:$0xff]
    %v223 = vld [vmem:[%s4] sm:$0xff]
    %v224 = vld [vmem:[%s4 + $0x8] sm:$0xff]
    %226 = vset.pattern.permute.xlu0 0
    %227 = vperm.xlu0 %226, %v223
    %v228 = vpop.permute.xlu0 %227
    %231 = vset.pattern.permute.xlu0 0
    %232 = vperm.xlu0 %231, %v224
    %v233 = vpop.permute.xlu0 %232
    %vm235 = vcmask 261120
    %v237 = vsel %vm235, %v221, 0
    %v240 = vsel %vm235, %v222, 0
    %242 = vmatprep.subr.mxu0 0.0
    %243 = vmatpush1.msra.mxu0 0.0
    %244 = vmatprep.subr.mxu0 0.0
    %245 = vmatpush1.msra.mxu0 0.0
    %246 = vmatprep.subr.mxu0 0.0
    %247 = vmatpush1.msra.mxu0 0.0
    %248 = vmatprep.subr.mxu0 0.0
    %249 = vmatpush1.msra.mxu0 0.0
    %250 = vmatprep.subr.mxu0 0.0
    %251 = vmatpush1.msra.mxu0 0.0
    %252 = vmatprep.subr.mxu0 0.0
    %253 = vmatpush1.msra.mxu0 0.0
    %254 = vmatprep.subr.mxu0 0.0
    %255 = vmatpush1.msra.mxu0 0.0
    %256 = vmatprep.subr.mxu0 0.0
    %257 = vmatpush1.msra.mxu0 0.0
    %258 = vmatprep.subr.mxu0 0.0
    %259 = vmatpush1.msra.mxu0 0.0
    %260 = vmatprep.subr.mxu0 0.0
    %261 = vmatpush1.msra.mxu0 0.0
    %262 = vmatprep.subr.mxu0 0.0
    %263 = vmatpush1.msra.mxu0 0.0
    %264 = vmatprep.subr.mxu0 0.0
    %265 = vmatpush1.msra.mxu0 0.0
    %266 = vmatprep.subr.mxu0 0.0
    %267 = vmatpush1.msra.mxu0 %v220
    %268 = vmatprep.subr.mxu0 0.0
    %269 = vmatpush1.msra.mxu0 %v219
    %270 = vmatprep.subr.mxu0 0.0
    %271 = vmatpush1.msra.mxu0 %v218
    %272 = vmatprep.subr.mxu0 0.0
    %273 = vmatpush1.msra.mxu0 %v217
    %274 = vmatprep.subr.mxu0 0.0
    %275 = vmatpush2.msra.mxu0 0.0
    %276 = vmatprep.subr.mxu0 0.0
    %277 = vmatpush2.msra.mxu0 0.0
    %278 = vmatprep.subr.mxu0 0.0
    %279 = vmatpush2.msra.mxu0 0.0
    %280 = vmatprep.subr.mxu0 0.0
    %281 = vmatpush2.msra.mxu0 0.0
    %282 = vmatprep.subr.mxu0 0.0
    %283 = vmatpush2.msra.mxu0 0.0
    %284 = vmatprep.subr.mxu0 0.0
    %285 = vmatpush2.msra.mxu0 0.0
    %286 = vmatprep.subr.mxu0 0.0
    %287 = vmatpush2.msra.mxu0 0.0
    %288 = vmatprep.subr.mxu0 0.0
    %289 = vmatpush2.msra.mxu0 0.0
    %290 = vmatprep.subr.mxu0 0.0
    %291 = vmatpush2.msra.mxu0 0.0
    %292 = vmatprep.subr.mxu0 0.0
    %293 = vmatpush2.msra.mxu0 0.0
    %294 = vmatprep.subr.mxu0 0.0
    %295 = vmatpush2.msra.mxu0 0.0
    %296 = vmatprep.subr.mxu0 0.0
    %297 = vmatpush2.msra.mxu0 0.0
    %298 = vmatprep.subr.mxu0 0.0
    %299 = vmatpush2.msra.mxu0 0.0
    %300 = vmatprep.subr.mxu0 0.0
    %301 = vmatpush2.msra.mxu0 0.0
    %302 = vmatprep.subr.mxu0 0.0
    %303 = vmatpush2.msra.mxu0 0.0
    %304 = vmatprep.subr.mxu0 0.0
    %305 = vmatpush2.msra.mxu0 0.0
    %306 = vmatprep.mubr.f32.mxu0 0.0
    %307 = vmatmul.mubr.f32.gmra.mxu0 %v237
    %v308 = vpop.f32.mrf.mxu0
    %v309 = vadd.f32 %v228, %v308
    %v310 = vpop.f32.mrf.mxu0
    %311 = vmatprep.mubr.f32.mxu0 0.0
    %312 = vmatmul.mubr.f32.gmra.mxu0 %v240
    %v313 = vpop.f32.mrf.mxu0
    %v314 = vadd.f32 %v233, %v313
    %v315 = vpop.f32.mrf.mxu0
    %316 = vdwg.mxu0
    %v317 = vmax.f32 %v309, 0.0
    %v318 = vmax.f32 %v314, 0.0
    %v319 = vld [vmem:[%s5] sm:$0x7]
    %v320 = vld [vmem:[%s6] sm:$0x7]
    %322 = vset.pattern.permute.xlu0 0
    %323 = vperm.xlu0 %322, %v320
    %v324 = vpop.permute.xlu0 %323
    %v327 = vsel %vm71, %v319, 0
    %329 = vmatprep.subr.mxu0 0.0
    %330 = vmatpush1.msra.mxu0 0.0
    %331 = vmatprep.subr.mxu0 0.0
    %332 = vmatpush1.msra.mxu0 0.0
    %333 = vmatprep.subr.mxu0 0.0
    %334 = vmatpush1.msra.mxu0 0.0
    %335 = vmatprep.subr.mxu0 0.0
    %336 = vmatpush1.msra.mxu0 0.0
    %337 = vmatprep.subr.mxu0 0.0
    %338 = vmatpush1.msra.mxu0 0.0
    %339 = vmatprep.subr.mxu0 0.0
    %340 = vmatpush1.msra.mxu0 0.0
    %341 = vmatprep.subr.mxu0 0.0
    %342 = vmatpush1.msra.mxu0 0.0
    %343 = vmatprep.subr.mxu0 0.0
    %344 = vmatpush1.msra.mxu0 0.0
    %345 = vmatprep.subr.mxu0 0.0
    %346 = vmatpush1.msra.mxu0 0.0
    %347 = vmatprep.subr.mxu0 0.0
    %348 = vmatpush1.msra.mxu0 0.0
    %349 = vmatprep.subr.mxu0 0.0
    %350 = vmatpush1.msra.mxu0 0.0
    %351 = vmatprep.subr.mxu0 0.0
    %352 = vmatpush1.msra.mxu0 0.0
    %353 = vmatprep.subr.mxu0 0.0
    %354 = vmatpush1.msra.mxu0 0.0
    %355 = vmatprep.subr.mxu0 0.0
    %356 = vmatpush1.msra.mxu0 0.0
    %357 = vmatprep.subr.mxu0 0.0
    %358 = vmatpush1.msra.mxu0 %v318
    %359 = vmatprep.subr.mxu0 0.0
    %360 = vmatpush1.msra.mxu0 %v317
    %361 = vmatprep.subr.mxu0 0.0
    %362 = vmatpush2.msra.mxu0 0.0
    %363 = vmatprep.subr.mxu0 0.0
    %364 = vmatpush2.msra.mxu0 0.0
    %365 = vmatprep.subr.mxu0 0.0
    %366 = vmatpush2.msra.mxu0 0.0
    %367 = vmatprep.subr.mxu0 0.0
    %368 = vmatpush2.msra.mxu0 0.0
    %369 = vmatprep.subr.mxu0 0.0
    %370 = vmatpush2.msra.mxu0 0.0
    %371 = vmatprep.subr.mxu0 0.0
    %372 = vmatpush2.msra.mxu0 0.0
    %373 = vmatprep.subr.mxu0 0.0
    %374 = vmatpush2.msra.mxu0 0.0
    %375 = vmatprep.subr.mxu0 0.0
    %376 = vmatpush2.msra.mxu0 0.0
    %377 = vmatprep.subr.mxu0 0.0
    %378 = vmatpush2.msra.mxu0 0.0
    %379 = vmatprep.subr.mxu0 0.0
    %380 = vmatpush2.msra.mxu0 0.0
    %381 = vmatprep.subr.mxu0 0.0
    %382 = vmatpush2.msra.mxu0 0.0
    %383 = vmatprep.subr.mxu0 0.0
    %384 = vmatpush2.msra.mxu0 0.0
    %385 = vmatprep.subr.mxu0 0.0
    %386 = vmatpush2.msra.mxu0 0.0
    %387 = vmatprep.subr.mxu0 0.0
    %388 = vmatpush2.msra.mxu0 0.0
    %389 = vmatprep.subr.mxu0 0.0
    %390 = vmatpush2.msra.mxu0 0.0
    %391 = vmatprep.subr.mxu0 0.0
    %392 = vmatpush2.msra.mxu0 0.0
    %393 = vmatprep.mubr.f32.mxu0 0.0
    %394 = vmatmul.mubr.f32.gmra.mxu0 %v327
    %v395 = vpop.f32.mrf.mxu0
    %v396 = vadd.f32 %v324, %v395
    %v397 = vpop.f32.mrf.mxu0
    %398 = vdwg.mxu0
    %vm399 = vcmask 1042432
    %v400 = vsel %vm399, %v396, -inf
    %v401 = vrot.slane %v400, 4
    %v402 = vmax.f32 %v400, %v401
    %v403 = vrot.slane %v402, 2
    %v404 = vmax.f32 %v402, %v403
    %v405 = vrot.slane %v404, 1
    %v406 = vmax.f32 %v404, %v405
    %v407 = vsub.f32 %v396, %v406
    %v408 = vmul.f32 %v407, 1.442695
    %v409 = vpow.pop %v408
    %v410 = vsel %vm399, %v409, 0.0
    %v411 = vrot.slane %v410, 4
    %v412 = vadd.f32 %v410, %v411
    %v413 = vrot.slane %v412, 2
    %v414 = vadd.f32 %v412, %v413
    %v415 = vrot.slane %v414, 1
    %v416 = vadd.f32 %v414, %v415
    %v417 = vrcp.pop %v416
    %v418 = vmul.f32 %v409, %v417
    %419 = vst [vmem:[#allocation2] sm:$0x7] %v418
    // Predicated region
    $region30: #{tpu_custom_call.1} parent=1 // pred_check
      _
    $region31: #{tpu_custom_call.1} parent=1 // pred_check_branch
      %421 = sbr.rel (0) target = $region33
    $region32: #{tpu_custom_call.1} parent=1 // pred_region
      %s423 = ssub.s32 64, 64
      %424 = vsyncadd [#allocation3], %s423
      %s426 = sshll.u32 [#allocation2], 4
      %s427 = int_to_ptr.vmem [resolvable:$true] %s426
      %429 = dma.vmem_to_hbm [thread:$0]  %s427, 64, %s7, [#allocation3]
    $region33: #{tpu_custom_call.1} parent=1 // pred_fallthru
      _
    // Predicated region
    $region34: #{tpu_custom_call.1} parent=1 // pred_check
      _
    $region35: #{tpu_custom_call.1} parent=1 // pred_check_branch
      %431 = sbr.rel (0) target = $region37
    $region36: #{tpu_custom_call.1} parent=1 // pred_region
      %432 = dma.done [#allocation3], 64
    $region37: #{tpu_custom_call.1} parent=1 // pred_fallthru
      _
    %433 = vsyncpa [#allocation3], 1

</llo_original>
